<compile_context>
chip_gen: v7x
topology: tpu7x:2x2x1
jax: 0.10.0
libtpu: 0.0.40
codegen_flags: <defaults>
</compile_context>

<pallas_src>
from functools import partial

import jax
import jax.numpy as jnp
from jax.experimental import pallas as pl
from jax.experimental.pallas import tpu as pltpu


def mlp_kernel(x_ref, w1b_ref, w2b_ref, o_ref):
    # Static shapes recovered from the refs (known at trace time).
    f = w1b_ref.shape[0] - 1      # NumOfFeature
    hp = w2b_ref.shape[0] - 1     # padded hidden width (lane-dense)

    # Layer 1: f32 matmul on the MXU, fused bias (+last row of packed buf)
    # and ReLU epilogue on the VPU.
    h = jnp.dot(x_ref[...], w1b_ref[:f, :],
                preferred_element_type=jnp.float32)
    h = jnp.maximum(h + w1b_ref[f:f + 1, :], 0.0)

    # Layer 2: f32 matmul + bias; padded hidden columns are exactly zero so
    # they contribute nothing.
    y = jnp.dot(h, w2b_ref[:hp, :], preferred_element_type=jnp.float32)
    y = y + w2b_ref[hp:hp + 1, :]

    o_ref[...] = y.astype(o_ref.dtype)


def pack_params(w1, b1, w2, b2, *, lane=128):
    """One-time parameter prep (hoisted out of the hot path).

    Packs each Linear's (weight, bias) into a single contiguous f32 buffer
    with the bias as the last row, and zero-pads the hidden / label dims to
    the 128-lane width so everything the kernel touches is lane-dense.
      w1:(F,H) b1:(1,H) w2:(H,L) b2:(1,L)  ->  w1b:(F+1,Hp), w2b:(Hp+1,Lp)
    """
    F, H = w1.shape
    L = w2.shape[1]
    Hp = ((H + lane - 1) // lane) * lane
    Lp = ((L + lane - 1) // lane) * lane

    w1b = jnp.zeros((F + 1, Hp), jnp.float32)
    w1b = w1b.at[:F, :H].set(w1.astype(jnp.float32))
    w1b = w1b.at[F, :H].set(b1.reshape(-1).astype(jnp.float32))

    w2b = jnp.zeros((Hp + 1, Lp), jnp.float32)
    w2b = w2b.at[:H, :L].set(w2.astype(jnp.float32))
    w2b = w2b.at[Hp, :L].set(b2.reshape(-1).astype(jnp.float32))

    return w1b, w2b


@partial(jax.jit, static_argnames=("num_labels",))
def mlp_forward(x, w1b, w2b, *, num_labels):
    """x:(B,F) f32, packed params from pack_params. Returns (B,num_labels) f32."""
    B, F = x.shape
    Hp = w1b.shape[1]
    Lp = w2b.shape[1]

    cost = pl.CostEstimate(
        flops=2 * B * (F * Hp + Hp * Lp),
        transcendentals=0,
        bytes_accessed=4 * (x.size + w1b.size + w2b.size + B * Lp),
    )

    vmem = pl.BlockSpec(memory_space=pltpu.MemorySpace.VMEM)
    y_pad = pl.pallas_call(
        mlp_kernel,
        out_shape=jax.ShapeDtypeStruct((B, Lp), jnp.float32),
        in_specs=[vmem, vmem, vmem],
        out_specs=vmem,
        cost_estimate=cost,
    )(x, w1b, w2b)

    # Kernel pays for the lane-dense unmasked store; this slice fuses into
    # the same jitted executable (no extra dispatch).
    return y_pad[:, :num_labels]


def init_linear_params(key, fan_in, fan_out, dtype=jnp.float32):
    """PyTorch nn.Linear default init: U(-1/sqrt(fan_in), 1/sqrt(fan_in))."""
    k_w, k_b = jax.random.split(key)
    bound = 1.0 / jnp.sqrt(fan_in)
    # Stored already transposed to (in, out) for the kernel.
    w = jax.random.uniform(k_w, (fan_in, fan_out), dtype, -bound, bound)
    b = jax.random.uniform(k_b, (1, fan_out), dtype, -bound, bound)
    return w, b


if __name__ == "__main__":
    NumOfFeature = 32
    NumOfHiddenLayerNodes = 64
    NumOfLabel = 16
    batch = 8

    key = jax.random.PRNGKey(0)
    k_x, k_fc1, k_fc2 = jax.random.split(key, 3)

    x = jax.random.normal(k_x, (batch, NumOfFeature), jnp.float32)
    w1, b1 = init_linear_params(k_fc1, NumOfFeature, NumOfHiddenLayerNodes)
    w2, b2 = init_linear_params(k_fc2, NumOfHiddenLayerNodes, NumOfLabel)

    # One-time packing / padding of parameters (not on the per-call path).
    w1b, w2b = pack_params(w1, b1, w2, b2)
    w1b, w2b = jax.block_until_ready((w1b, w2b))

    out = mlp_forward(x, w1b, w2b, num_labels=NumOfLabel)
    out = jax.block_until_ready(out)
    assert out.shape == (batch, NumOfLabel)

    # Pure f32 reference: exact PyTorch-equivalent math.
    ref = jnp.maximum(x @ w1 + b1, 0.0) @ w2 + b2
    assert jnp.allclose(out, ref, atol=1e-3, rtol=1e-3), (
        float(jnp.max(jnp.abs(out - ref))))

    print("KERNEL_OK")
</pallas_src>

<mosaic_0001>
module attributes {stable_mosaic.version = 11 : i64} {
  func.func @mlp_kernel(%arg0: memref<8x32xf32, #tpu.memory_space<vmem>>, %arg1: memref<33x128xf32, #tpu.memory_space<vmem>>, %arg2: memref<129x128xf32, #tpu.memory_space<vmem>>, %arg3: memref<8x128xf32, #tpu.memory_space<vmem>>) attributes {dimension_semantics = [], scalar_prefetch = 0 : i64, scratch_operands = 0 : i64, tpu.core_type = #tpu.core_type<tc>} {
    %c0 = arith.constant 0 : index
    %c0_0 = arith.constant 0 : index
    %0 = vector.load %arg0[%c0, %c0_0] : memref<8x32xf32, #tpu.memory_space<vmem>>, vector<8x32xf32>
    %c0_1 = arith.constant 0 : index
    %c0_2 = arith.constant 0 : index
    %1 = vector.load %arg1[%c0_1, %c0_2] : memref<33x128xf32, #tpu.memory_space<vmem>>, vector<32x128xf32>
    %cst = arith.constant dense<0.000000e+00> : vector<8x128xf32>
    %2 = tpu.matmul %0, %1, %cst {dimension_numbers = #tpu.dot_dimension_numbers<[1], [0], [0], [1], [0, 0, 1, 1], [], []>} : vector<8x32xf32>, vector<32x128xf32>, vector<8x128xf32> -> vector<8x128xf32>
    %c32 = arith.constant 32 : index
    %c0_3 = arith.constant 0 : index
    %3 = vector.load %arg1[%c32, %c0_3] : memref<33x128xf32, #tpu.memory_space<vmem>>, vector<1x128xf32>
    %4 = vector.broadcast %3 : vector<1x128xf32> to vector<8x128xf32>
    %5 = arith.addf %2, %4 : vector<8x128xf32>
    %cst_4 = arith.constant 0.000000e+00 : f32
    %6 = vector.broadcast %cst_4 : f32 to vector<8x128xf32>
    %7 = arith.maximumf %5, %6 : vector<8x128xf32>
    %c0_5 = arith.constant 0 : index
    %c0_6 = arith.constant 0 : index
    %8 = vector.load %arg2[%c0_5, %c0_6] : memref<129x128xf32, #tpu.memory_space<vmem>>, vector<128x128xf32>
    %cst_7 = arith.constant dense<0.000000e+00> : vector<8x128xf32>
    %9 = tpu.matmul %7, %8, %cst_7 {dimension_numbers = #tpu.dot_dimension_numbers<[1], [0], [0], [1], [0, 0, 1, 1], [], []>} : vector<8x128xf32>, vector<128x128xf32>, vector<8x128xf32> -> vector<8x128xf32>
    %c128 = arith.constant 128 : index
    %c0_8 = arith.constant 0 : index
    %10 = vector.load %arg2[%c128, %c0_8] : memref<129x128xf32, #tpu.memory_space<vmem>>, vector<1x128xf32>
    %11 = vector.broadcast %10 : vector<1x128xf32> to vector<8x128xf32>
    %12 = arith.addf %9, %11 : vector<8x128xf32>
    %c0_9 = arith.constant 0 : index
    %c0_10 = arith.constant 0 : index
    %13 = vector.load %arg3[%c0_9, %c0_10] : memref<8x128xf32, #tpu.memory_space<vmem>>, vector<8x128xf32>
    tpu.vector_store %arg3[%c0_9, %c0_10], %12 {strides = array<i32>} : memref<8x128xf32, #tpu.memory_space<vmem>>, vector<8x128xf32>,
    return
  }
}

</mosaic_0001>

<llo_original>
// kernel: mlp_forward.1
$region0: #{mlp_forward.1}
  #allocation0 [shape = 'u32[]', space=smem, size = 0x4, offset = 0x4, fixed_abs, tag = 'smem constant byte address 0x4 - core index']
  #allocation1 [shape = 'u32[144,128]{1,0:T(1,128)}', space=vmem, size = 0x12000, scoped, tag = 'internal scratch']
  %s0 = inlined_call_operand.hbm [shape: f32[8,32], index: 0, kind: input, shape index: {}]
  %s1 = inlined_call_operand.hbm [shape: f32[33,128], index: 1, kind: input, shape index: {}]
  %s2 = inlined_call_operand.hbm [shape: f32[129,128], index: 2, kind: input, shape index: {}]
  %s3 = inlined_call_operand.hbm [shape: f32[8,128], index: 3, kind: output, shape index: {}]
  %s4 = sld [smem:[#allocation0]]
  $region34: #{mlp_forward.1} parent=0
    _
  %s6 = ssub.s32 1, %s4
  %s7 = scalar_select 0, %s6, %s4
  $region1: #{mlp_forward.1} parent=0
    #allocation2 [shape = 'u8[4096]{0}', space=vmem, size = 0x1000, scoped, tag = 'input window, operand 0, single buffered']
    #allocation3 [shape = 's32[1]{0}', space=sflag, size = 0x4, scoped, tag = 'scoped memory for mlp_forward.1']
    #allocation4 [shape = 's32[1]{0}', space=sflag, size = 0x4, scoped, tag = 'scoped memory for mlp_forward.1']
    #allocation5 [shape = 'u8[20480]{0}', space=vmem, size = 0x5000, scoped, tag = 'input window, operand 1, single buffered']
    #allocation6 [shape = 's32[1]{0}', space=sflag, size = 0x4, scoped, tag = 'scoped memory for mlp_forward.1']
    #allocation7 [shape = 'u8[69632]{0}', space=vmem, size = 0x11000, scoped, tag = 'input window, operand 2, single buffered']
    #allocation8 [shape = 'u8[4096]{0}', space=vmem, size = 0x1000, scoped, tag = 'output window, operand 0, single buffered']
    %8 = vsyncpa [#allocation3], 0
    %9 = vsyncpa [#allocation6], 0
    %10 = vsyncpa [#allocation4], 0
    // Predicated region
    $region2: #{mlp_forward.1} parent=1 // pred_check
      _
    $region3: #{mlp_forward.1} parent=1 // pred_check_branch
      %12 = sbr.rel (0) target = $region5
    $region4: #{mlp_forward.1} parent=1 // pred_region
      %s14 = ssub.s32 128, 128
      %15 = vsyncadd [#allocation3], %s14
      %s17 = sshll.u32 [#allocation2], 4
      %s18 = int_to_ptr.vmem [resolvable:$true] %s17
      %20 = dma.hbm_to_vmem [thread:$0]  %s0, 128, %s18, [#allocation3]
    $region5: #{mlp_forward.1} parent=1 // pred_fallthru
      _
    // Predicated region
    $region6: #{mlp_forward.1} parent=1 // pred_check
      _
    $region7: #{mlp_forward.1} parent=1 // pred_check_branch
      %22 = sbr.rel (0) target = $region9
    $region8: #{mlp_forward.1} parent=1 // pred_region
      %s24 = ssub.s32 640, 640
      %25 = vsyncadd [#allocation6], %s24
      %s26 = sshll.u32 [#allocation5], 4
      %s27 = int_to_ptr.vmem [resolvable:$true] %s26
      %32 = dma.hbm_to_vmem [thread:$0]  %s1, 640, %s27, [#allocation6], 128, 128, 8
    $region9: #{mlp_forward.1} parent=1 // pred_fallthru
      _
    // Predicated region
    $region10: #{mlp_forward.1} parent=1 // pred_check
      _
    $region11: #{mlp_forward.1} parent=1 // pred_check_branch
      %34 = sbr.rel (0) target = $region13
    $region12: #{mlp_forward.1} parent=1 // pred_region
      %s36 = ssub.s32 2176, 2176
      %37 = vsyncadd [#allocation6], %s36
      %s38 = sshll.u32 [#allocation7], 4
      %s39 = int_to_ptr.vmem [resolvable:$true] %s38
      %44 = dma.hbm_to_vmem [thread:$0]  %s2, 2176, %s39, [#allocation6], 128, 128, 8
    $region13: #{mlp_forward.1} parent=1 // pred_fallthru
      _
    // Predicated region
    $region14: #{mlp_forward.1} parent=1 // pred_check
      _
    $region15: #{mlp_forward.1} parent=1 // pred_check_branch
      %46 = sbr.rel (0) target = $region17
    $region16: #{mlp_forward.1} parent=1 // pred_region
      %47 = dma.done [#allocation3], 128
    $region17: #{mlp_forward.1} parent=1 // pred_fallthru
      _
    // Predicated region
    $region18: #{mlp_forward.1} parent=1 // pred_check
      _
    $region19: #{mlp_forward.1} parent=1 // pred_check_branch
      %49 = sbr.rel (0) target = $region21
    $region20: #{mlp_forward.1} parent=1 // pred_region
      %50 = dma.done [#allocation6], 640
    $region21: #{mlp_forward.1} parent=1 // pred_fallthru
      _
    // Predicated region
    $region22: #{mlp_forward.1} parent=1 // pred_check
      _
    $region23: #{mlp_forward.1} parent=1 // pred_check_branch
      %52 = sbr.rel (0) target = $region25
    $region24: #{mlp_forward.1} parent=1 // pred_region
      %53 = dma.done [#allocation6], 2176
    $region25: #{mlp_forward.1} parent=1 // pred_fallthru
      _
    %v54 = vld [vmem:[#allocation2] sm:$0xff]
    %v55 = vld [vmem:[#allocation5] sm:$0xff]
    %v56 = vld [vmem:[#allocation5 + $0x8] sm:$0xff]
    %v57 = vld [vmem:[#allocation5 + $0x10] sm:$0xff]
    %v58 = vld [vmem:[#allocation5 + $0x18] sm:$0xff]
    %v59 = vld [vmem:[#allocation5 + $0x20] sm:$0x1]
    %v60 = vlaneseq
    %v61 = vshrl.u32 %v60, 7
    %v62 = vsub.s32 0, %v61
    %v63 = vrot.slane %v59, %v62
    %vm64 = vcmask 261120
    %v66 = vsel %vm64, %v54, 0
    %68 = vmatprep.subr.mxu0 0.0
    %69 = vmatpush1.msra.mxu0 %v55
    %70 = vmatprep.subr.mxu0 0.0
    %71 = vmatpush1.msra.mxu0 %v56
    %72 = vmatprep.subr.mxu0 0.0
    %73 = vmatpush1.msra.mxu0 %v57
    %74 = vmatprep.subr.mxu0 0.0
    %75 = vmatpush1.msra.mxu0 %v58
    %76 = vmatprep.subr.mxu0 0.0
    %77 = vmatpush1.msra.mxu0 0.0
    %78 = vmatprep.subr.mxu0 0.0
    %79 = vmatpush1.msra.mxu0 0.0
    %80 = vmatprep.subr.mxu0 0.0
    %81 = vmatpush1.msra.mxu0 0.0
    %82 = vmatprep.subr.mxu0 0.0
    %83 = vmatpush1.msra.mxu0 0.0
    %84 = vmatprep.subr.mxu0 0.0
    %85 = vmatpush1.msra.mxu0 0.0
    %86 = vmatprep.subr.mxu0 0.0
    %87 = vmatpush1.msra.mxu0 0.0
    %88 = vmatprep.subr.mxu0 0.0
    %89 = vmatpush1.msra.mxu0 0.0
    %90 = vmatprep.subr.mxu0 0.0
    %91 = vmatpush1.msra.mxu0 0.0
    %92 = vmatprep.subr.mxu0 0.0
    %93 = vmatpush1.msra.mxu0 0.0
    %94 = vmatprep.subr.mxu0 0.0
    %95 = vmatpush1.msra.mxu0 0.0
    %96 = vmatprep.subr.mxu0 0.0
    %97 = vmatpush1.msra.mxu0 0.0
    %98 = vmatprep.subr.mxu0 0.0
    %99 = vmatpush1.msra.mxu0 0.0
    %100 = vmatprep.subr.mxu0 0.0
    %101 = vmatpush1.msra.mxu0 0.0
    %102 = vmatprep.subr.mxu0 0.0
    %103 = vmatpush1.msra.mxu0 0.0
    %104 = vmatprep.subr.mxu0 0.0
    %105 = vmatpush1.msra.mxu0 0.0
    %106 = vmatprep.subr.mxu0 0.0
    %107 = vmatpush1.msra.mxu0 0.0
    %108 = vmatprep.subr.mxu0 0.0
    %109 = vmatpush1.msra.mxu0 0.0
    %110 = vmatprep.subr.mxu0 0.0
    %111 = vmatpush1.msra.mxu0 0.0
    %112 = vmatprep.subr.mxu0 0.0
    %113 = vmatpush1.msra.mxu0 0.0
    %114 = vmatprep.subr.mxu0 0.0
    %115 = vmatpush1.msra.mxu0 0.0
    %116 = vmatprep.subr.mxu0 0.0
    %117 = vmatpush1.msra.mxu0 0.0
    %118 = vmatprep.subr.mxu0 0.0
    %119 = vmatpush1.msra.mxu0 0.0
    %120 = vmatprep.subr.mxu0 0.0
    %121 = vmatpush1.msra.mxu0 0.0
    %122 = vmatprep.subr.mxu0 0.0
    %123 = vmatpush1.msra.mxu0 0.0
    %124 = vmatprep.subr.mxu0 0.0
    %125 = vmatpush1.msra.mxu0 0.0
    %126 = vmatprep.subr.mxu0 0.0
    %127 = vmatpush1.msra.mxu0 0.0
    %128 = vmatprep.subr.mxu0 0.0
    %129 = vmatpush1.msra.mxu0 0.0
    %130 = vmatprep.subr.mxu0 0.0
    %131 = vmatpush1.msra.mxu0 0.0
    %132 = vmatprep.mubr.f32.mxu0 0.0
    %133 = vmatmul.mubr.f32.gmra.mrb[0].mxu0 %v66
    %v134 = vpop.f32.mrb[0].mxu0
    %v135 = vadd.f32 %v63, %v134
    %v136 = vpop.f32.mrb[0].mxu0
    %137 = vdwg.mxu0
    %v138 = vmax.f32 %v135, 0.0
    %v139 = vld [vmem:[#allocation7] sm:$0xff]
    %v140 = vld [vmem:[#allocation7 + $0x8] sm:$0xff]
    %v141 = vld [vmem:[#allocation7 + $0x10] sm:$0xff]
    %v142 = vld [vmem:[#allocation7 + $0x18] sm:$0xff]
    %v143 = vld [vmem:[#allocation7 + $0x20] sm:$0xff]
    %v144 = vld [vmem:[#allocation7 + $0x28] sm:$0xff]
    %v145 = vld [vmem:[#allocation7 + $0x30] sm:$0xff]
    %v146 = vld [vmem:[#allocation7 + $0x38] sm:$0xff]
    %v147 = vld [vmem:[#allocation7 + $0x40] sm:$0xff]
    %v148 = vld [vmem:[#allocation7 + $0x48] sm:$0xff]
    %v149 = vld [vmem:[#allocation7 + $0x50] sm:$0xff]
    %v150 = vld [vmem:[#allocation7 + $0x58] sm:$0xff]
    %v151 = vld [vmem:[#allocation7 + $0x60] sm:$0xff]
    %v152 = vld [vmem:[#allocation7 + $0x68] sm:$0xff]
    %v153 = vld [vmem:[#allocation7 + $0x70] sm:$0xff]
    %v154 = vld [vmem:[#allocation7 + $0x78] sm:$0xff]
    %v155 = vld [vmem:[#allocation7 + $0x80] sm:$0x1]
    %v156 = vlaneseq
    %v157 = vshrl.u32 %v156, 7
    %v158 = vsub.s32 0, %v157
    %v159 = vrot.slane %v155, %v158
    %160 = vmatprep.subr.mxu0 0.0
    %161 = vmatpush1.msra.mxu0 %v139
    %162 = vmatprep.subr.mxu0 0.0
    %163 = vmatpush1.msra.mxu0 %v140
    %164 = vmatprep.subr.mxu0 0.0
    %165 = vmatpush1.msra.mxu0 %v141
    %166 = vmatprep.subr.mxu0 0.0
    %167 = vmatpush1.msra.mxu0 %v142
    %168 = vmatprep.subr.mxu0 0.0
    %169 = vmatpush1.msra.mxu0 %v143
    %170 = vmatprep.subr.mxu0 0.0
    %171 = vmatpush1.msra.mxu0 %v144
    %172 = vmatprep.subr.mxu0 0.0
    %173 = vmatpush1.msra.mxu0 %v145
    %174 = vmatprep.subr.mxu0 0.0
    %175 = vmatpush1.msra.mxu0 %v146
    %176 = vmatprep.subr.mxu0 0.0
    %177 = vmatpush1.msra.mxu0 %v147
    %178 = vmatprep.subr.mxu0 0.0
    %179 = vmatpush1.msra.mxu0 %v148
    %180 = vmatprep.subr.mxu0 0.0
    %181 = vmatpush1.msra.mxu0 %v149
    %182 = vmatprep.subr.mxu0 0.0
    %183 = vmatpush1.msra.mxu0 %v150
    %184 = vmatprep.subr.mxu0 0.0
    %185 = vmatpush1.msra.mxu0 %v151
    %186 = vmatprep.subr.mxu0 0.0
    %187 = vmatpush1.msra.mxu0 %v152
    %188 = vmatprep.subr.mxu0 0.0
    %189 = vmatpush1.msra.mxu0 %v153
    %190 = vmatprep.subr.mxu0 0.0
    %191 = vmatpush1.msra.mxu0 %v154
    %192 = vmatprep.subr.mxu0 0.0
    %193 = vmatpush1.msra.mxu0 0.0
    %194 = vmatprep.subr.mxu0 0.0
    %195 = vmatpush1.msra.mxu0 0.0
    %196 = vmatprep.subr.mxu0 0.0
    %197 = vmatpush1.msra.mxu0 0.0
    %198 = vmatprep.subr.mxu0 0.0
    %199 = vmatpush1.msra.mxu0 0.0
    %200 = vmatprep.subr.mxu0 0.0
    %201 = vmatpush1.msra.mxu0 0.0
    %202 = vmatprep.subr.mxu0 0.0
    %203 = vmatpush1.msra.mxu0 0.0
    %204 = vmatprep.subr.mxu0 0.0
    %205 = vmatpush1.msra.mxu0 0.0
    %206 = vmatprep.subr.mxu0 0.0
    %207 = vmatpush1.msra.mxu0 0.0
    %208 = vmatprep.subr.mxu0 0.0
    %209 = vmatpush1.msra.mxu0 0.0
    %210 = vmatprep.subr.mxu0 0.0
    %211 = vmatpush1.msra.mxu0 0.0
    %212 = vmatprep.subr.mxu0 0.0
    %213 = vmatpush1.msra.mxu0 0.0
    %214 = vmatprep.subr.mxu0 0.0
    %215 = vmatpush1.msra.mxu0 0.0
    %216 = vmatprep.subr.mxu0 0.0
    %217 = vmatpush1.msra.mxu0 0.0
    %218 = vmatprep.subr.mxu0 0.0
    %219 = vmatpush1.msra.mxu0 0.0
    %220 = vmatprep.subr.mxu0 0.0
    %221 = vmatpush1.msra.mxu0 0.0
    %222 = vmatprep.subr.mxu0 0.0
    %223 = vmatpush1.msra.mxu0 0.0
    %224 = vmatprep.mubr.f32.mxu0 0.0
    %225 = vmatmul.mubr.f32.gmra.mrb[0].mxu0 %v138
    %v226 = vpop.f32.mrb[0].mxu0
    %v227 = vadd.f32 %v159, %v226
    %v228 = vpop.f32.mrb[0].mxu0
    %229 = vdwg.mxu0
    %230 = vst [vmem:[#allocation8] sm:$0xff] %v227
    // Predicated region
    $region26: #{mlp_forward.1} parent=1 // pred_check
      _
    $region27: #{mlp_forward.1} parent=1 // pred_check_branch
      %232 = sbr.rel (0) target = $region29
    $region28: #{mlp_forward.1} parent=1 // pred_region
      %s234 = ssub.s32 128, 128
      %235 = vsyncadd [#allocation4], %s234
      %s237 = sshll.u32 [#allocation8], 4
      %s238 = int_to_ptr.vmem [resolvable:$true] %s237
      %240 = dma.vmem_to_hbm [thread:$0]  %s238, 128, %s3, [#allocation4]
    $region29: #{mlp_forward.1} parent=1 // pred_fallthru
      _
    // Predicated region
    $region30: #{mlp_forward.1} parent=1 // pred_check
      _
    $region31: #{mlp_forward.1} parent=1 // pred_check_branch
      %242 = sbr.rel (0) target = $region33
    $region32: #{mlp_forward.1} parent=1 // pred_region
      %243 = dma.done [#allocation4], 128
    $region33: #{mlp_forward.1} parent=1 // pred_fallthru
      _
    %244 = vsyncpa [#allocation3], 1
    %245 = vsyncpa [#allocation6], 1
    %246 = vsyncpa [#allocation4], 1

</llo_original>
